<compile_context>
chip_gen: v5e
topology: v5e:2x2
jax: 0.10.0
libtpu: 0.0.40
codegen_flags: <defaults>
</compile_context>

<pallas_src>
import functools
import math

import jax
import jax.numpy as jnp
from jax import lax
from jax.experimental import pallas as pl
from jax.experimental.pallas import tpu as pltpu

_NEG_PAD = -1e30  # class-padding value: exp(s*_NEG_PAD - row_max) == 0


def _arcface_kernel(labels_ref, logits_ref, loss_ref, m_sc, l_sc, tgt_sc, *,
                    s, cos_m, sin_m, tile_b, tile_c, batch):
    i = pl.program_id(0)          # batch tile  ("parallel")
    j = pl.program_id(1)          # class tile  ("arbitrary", reduction, last)
    nc = pl.num_programs(1)

    @pl.when(j == 0)
    def _():
        m_sc[...] = jnp.full(m_sc.shape, -jnp.inf, jnp.float32)
        l_sc[...] = jnp.zeros(l_sc.shape, jnp.float32)
        tgt_sc[...] = jnp.zeros(tgt_sc.shape, jnp.float32)

    logits = logits_ref[...].astype(jnp.float32)           # (tile_b, tile_c)
    labels = labels_ref[...]                               # (tile_b, 1) int32

    col = j * tile_c + lax.broadcasted_iota(jnp.int32, (tile_b, tile_c), 1)
    is_lbl = col == labels                                 # (tile_b, tile_c)

    # positive cosine for rows whose label falls in this class tile (else 0, unused)
    pos = jnp.sum(jnp.where(is_lbl, logits, 0.0), axis=-1, keepdims=True)   # (tile_b, 1)
    x = jnp.clip(pos, -0.999, 0.999)
    # cos(acos(x) + m) = x*cos(m) - sqrt(1 - x^2)*sin(m)
    # clip(theta, 0, pi): theta > pi  <=>  x < -cos(m)  ->  cos(pi) = -1
    cos_theta_m = x * cos_m - jnp.sqrt(jnp.maximum(1.0 - x * x, 0.0)) * sin_m
    new_pos = jnp.where(x < -cos_m, -1.0, cos_theta_m)     # (tile_b, 1)
    spos = s * new_pos

    # accumulate the (scaled, margined) target value; exactly one class tile hits per row
    has_lbl = (labels >= j * tile_c) & (labels < (j + 1) * tile_c)          # (tile_b, 1)
    tgt_sc[...] += jnp.where(has_lbl, spos, 0.0)

    # scatter margined positive into the label column, scale by s
    z = jnp.where(is_lbl, spos, logits * s)                # (tile_b, tile_c)

    # online logsumexp across class tiles
    m_prev = m_sc[...]
    m_new = jnp.maximum(m_prev, jnp.max(z, axis=-1, keepdims=True))
    l_sc[...] = l_sc[...] * jnp.exp(m_prev - m_new) + \
        jnp.sum(jnp.exp(z - m_new), axis=-1, keepdims=True)
    m_sc[...] = m_new

    @pl.when(j == nc - 1)
    def _():
        lse = m_sc[...] + jnp.log(l_sc[...])
        loss_rows = lse - tgt_sc[...]                      # (tile_b, 1)
        row = i * tile_b + lax.broadcasted_iota(jnp.int32, (tile_b, 1), 0)
        loss_ref[...] = jnp.where(row < batch, loss_rows, 0.0)   # mask padded rows


def _round_up(x, n):
    return ((x + n - 1) // n) * n


def arcface_loss(logits, norms, labels, s: float = 64.0, m: float = 0.5,
                 tile_b: int | None = None, tile_c: int | None = None):
    """Pallas TPU implementation of ArcFace.forward. Returns the scalar mean loss."""
    del norms  # not used by the PyTorch forward pass
    B, C = logits.shape
    itemsize = jnp.dtype(logits.dtype).itemsize

    # Tile selection: ~2 MiB logits block (double-buffered by the pipeline), which
    # stays well inside the 32 MiB scoped-VMEM budget on all generations (incl. v7x)
    # while being large enough to run near the HBM roofline.
    block_budget = 2 * 1024 * 1024
    if tile_c is None:
        tile_c = min(_round_up(C, 128), 4096)
    if tile_b is None:
        tile_b = max(8, (block_budget // (tile_c * itemsize)) // 8 * 8)
        tile_b = min(tile_b, _round_up(B, 8))
    B_pad = _round_up(B, tile_b)
    C_pad = _round_up(C, tile_c)

    # Pad classes with a huge negative (vanishes in the softmax); pad rows with zeros
    # (padded rows are masked out of the loss inside the kernel). Native dtype is kept.
    if C_pad != C:
        logits = jnp.pad(logits, ((0, 0), (0, C_pad - C)), constant_values=_NEG_PAD)
    if B_pad != B:
        logits = jnp.pad(logits, ((0, B_pad - B), (0, 0)))
        labels = jnp.pad(labels, (0, B_pad - B))
    labels2 = labels.astype(jnp.int32).reshape(B_pad, 1)

    kernel = functools.partial(
        _arcface_kernel,
        s=float(s), cos_m=math.cos(m), sin_m=math.sin(m),
        tile_b=tile_b, tile_c=tile_c, batch=B)

    per_row = pl.pallas_call(
        kernel,
        out_shape=jax.ShapeDtypeStruct((B_pad, 1), jnp.float32),
        grid_spec=pltpu.PrefetchScalarGridSpec(
            num_scalar_prefetch=0,
            grid=(B_pad // tile_b, C_pad // tile_c),
            in_specs=[
                pl.BlockSpec((tile_b, 1), lambda i, j: (i, 0)),        # labels
                pl.BlockSpec((tile_b, tile_c), lambda i, j: (i, j)),   # logits (native dtype)
            ],
            out_specs=pl.BlockSpec((tile_b, 1), lambda i, j: (i, 0)),  # per-row loss
            scratch_shapes=[pltpu.VMEM((tile_b, 1), jnp.float32)] * 3,  # m, l, target
        ),
        compiler_params=pltpu.CompilerParams(
            dimension_semantics=("parallel", "arbitrary"),
            vmem_limit_bytes=32 * 1024 * 1024,
        ),
    )(labels2, logits)

    return jnp.sum(per_row) / B


def _arcface_ref(logits, labels, s=64.0, m=0.5):
    """Pure-JAX reference mirroring the PyTorch module."""
    B = logits.shape[0]
    pos = logits[jnp.arange(B), labels]
    theta = jnp.arccos(jnp.clip(pos, -0.999, 0.999)) + m
    new_pos = jnp.cos(jnp.clip(theta, 0.0, jnp.pi))
    mod = logits.at[jnp.arange(B), labels].set(new_pos) * s
    lse = jax.nn.logsumexp(mod, axis=-1)
    tgt = mod[jnp.arange(B), labels]
    return jnp.mean(lse - tgt)


if __name__ == "__main__":
    key = jax.random.PRNGKey(0)
    k1, k2, k3 = jax.random.split(key, 3)

    # logits are cosine similarities in [-1, 1]
    B, C = 16, 128
    logits = jax.random.uniform(k1, (B, C), dtype=jnp.float32, minval=-1.0, maxval=1.0)
    norms = jax.random.uniform(k2, (B,), dtype=jnp.float32, minval=0.5, maxval=2.0)
    labels = jax.random.randint(k3, (B,), 0, C, dtype=jnp.int32)

    loss = jax.block_until_ready(arcface_loss(logits, norms, labels, s=64.0, m=0.5))
    ref = _arcface_ref(logits, labels, s=64.0, m=0.5)
    assert jnp.allclose(loss, ref, rtol=5e-3, atol=1e-3), (loss, ref)

    # Ragged shapes + forced multi-tile class axis: exercises padding, row masking,
    # and the online-LSE reduction across class tiles.
    B2, C2 = 10, 200
    logits_r = jax.random.uniform(k1, (B2, C2), dtype=jnp.float32, minval=-1.0, maxval=1.0)
    norms_r = jnp.ones((B2,), jnp.float32)
    labels_r = jax.random.randint(k3, (B2,), 0, C2, dtype=jnp.int32)
    loss_r = jax.block_until_ready(
        arcface_loss(logits_r, norms_r, labels_r, s=64.0, m=0.5, tile_b=8, tile_c=128))
    ref_r = _arcface_ref(logits_r, labels_r, s=64.0, m=0.5)
    assert jnp.allclose(loss_r, ref_r, rtol=5e-3, atol=1e-3), (loss_r, ref_r)

    # TODO(synk): the PyTorch forward mutates `logits` in place; only the returned loss
    # is reproduced here (no aliasing of the input buffer).
    print("KERNEL_OK")
</pallas_src>

<mosaic_0001>
module attributes {stable_mosaic.version = 11 : i64} {
  func.func @_arcface_kernel(%arg0: i32, %arg1: i32, %arg2: memref<16x1xi32, #tpu.memory_space<vmem>>, %arg3: memref<16x128xf32, #tpu.memory_space<vmem>>, %arg4: memref<16x1xf32, #tpu.memory_space<vmem>>, %arg5: memref<16x1xf32, #tpu.memory_space<vmem>>, %arg6: memref<16x1xf32, #tpu.memory_space<vmem>>, %arg7: memref<16x1xf32, #tpu.memory_space<vmem>>) attributes {dimension_semantics = [#tpu.dimension_semantics<parallel>, #tpu.dimension_semantics<arbitrary>], iteration_bounds = array<i64: 1, 1>, scalar_prefetch = 0 : i64, scratch_operands = 3 : i64, tpu.core_type = #tpu.core_type<tc>, window_params = [{transform_indices = @transform_0, window_bounds = array<i64: 16, 1>}, {transform_indices = @transform_1, window_bounds = array<i64: 16, 128>}, {transform_indices = @transform_2, window_bounds = array<i64: 16, 1>}]} {
    %c0_i32 = arith.constant 0 : i32
    %0 = arith.cmpi eq, %arg1, %c0_i32 : i32
    %1 = arith.extui %0 : i1 to i32
    %c0_i32_0 = arith.constant 0 : i32
    %2 = arith.cmpi ne, %1, %c0_i32_0 : i32
    scf.if %2 {
      %cst_34 = arith.constant 0xFF800000 : f32
      %73 = vector.broadcast %cst_34 : f32 to vector<16x1xf32>
      %c0_35 = arith.constant 0 : index
      %c0_36 = arith.constant 0 : index
      %74 = vector.load %arg5[%c0_35, %c0_36] : memref<16x1xf32, #tpu.memory_space<vmem>>, vector<16x1xf32>
      tpu.vector_store %arg5[%c0_35, %c0_36], %73 {strides = array<i32>} : memref<16x1xf32, #tpu.memory_space<vmem>>, vector<16x1xf32>,
      %cst_37 = arith.constant 0.000000e+00 : f32
      %75 = vector.broadcast %cst_37 : f32 to vector<16x1xf32>
      %c0_38 = arith.constant 0 : index
      %c0_39 = arith.constant 0 : index
      %76 = vector.load %arg6[%c0_38, %c0_39] : memref<16x1xf32, #tpu.memory_space<vmem>>, vector<16x1xf32>
      tpu.vector_store %arg6[%c0_38, %c0_39], %75 {strides = array<i32>} : memref<16x1xf32, #tpu.memory_space<vmem>>, vector<16x1xf32>,
      %cst_40 = arith.constant 0.000000e+00 : f32
      %77 = vector.broadcast %cst_40 : f32 to vector<16x1xf32>
      %c0_41 = arith.constant 0 : index
      %c0_42 = arith.constant 0 : index
      %78 = vector.load %arg7[%c0_41, %c0_42] : memref<16x1xf32, #tpu.memory_space<vmem>>, vector<16x1xf32>
      tpu.vector_store %arg7[%c0_41, %c0_42], %77 {strides = array<i32>} : memref<16x1xf32, #tpu.memory_space<vmem>>, vector<16x1xf32>,
    } else {
    }
    %c0 = arith.constant 0 : index
    %c0_1 = arith.constant 0 : index
    %3 = vector.load %arg3[%c0, %c0_1] : memref<16x128xf32, #tpu.memory_space<vmem>>, vector<16x128xf32>
    %c0_2 = arith.constant 0 : index
    %c0_3 = arith.constant 0 : index
    %4 = vector.load %arg2[%c0_2, %c0_3] : memref<16x1xi32, #tpu.memory_space<vmem>>, vector<16x1xi32>
    %c128_i32 = arith.constant 128 : i32
    %5 = arith.muli %arg1, %c128_i32 : i32
    %6 = tpu.iota {dimensions = array<i32: 1>} : vector<16x128xi32>
    %7 = vector.broadcast %5 : i32 to vector<16x128xi32>
    %8 = arith.addi %7, %6 : vector<16x128xi32>
    %9 = vector.broadcast %4 : vector<16x1xi32> to vector<16x128xi32>
    %10 = arith.cmpi eq, %8, %9 : vector<16x128xi32>
    %cst = arith.constant 0.000000e+00 : f32
    %11 = vector.broadcast %cst : f32 to vector<16x128xf32>
    %12 = arith.select %10, %3, %11 : vector<16x128xi1>, vector<16x128xf32>
    %cst_4 = arith.constant dense<0.000000e+00> : vector<16xf32>
    %13 = vector.multi_reduction <add>, %12, %cst_4 [1] : vector<16x128xf32> to vector<16xf32>
    %14 = vector.shape_cast %13 : vector<16xf32> to vector<16x1xf32>
    %cst_5 = arith.constant -9.990000e-01 : f32
    %cst_6 = arith.constant 9.990000e-01 : f32
    %15 = vector.broadcast %cst_5 : f32 to vector<16x1xf32>
    %16 = arith.maximumf %15, %14 : vector<16x1xf32>
    %17 = vector.broadcast %cst_6 : f32 to vector<16x1xf32>
    %18 = arith.minimumf %17, %16 : vector<16x1xf32>
    %cst_7 = arith.constant 0.87758255 : f32
    %19 = vector.broadcast %cst_7 : f32 to vector<16x1xf32>
    %20 = arith.mulf %18, %19 : vector<16x1xf32>
    %21 = arith.mulf %18, %18 : vector<16x1xf32>
    %cst_8 = arith.constant 1.000000e+00 : f32
    %22 = vector.broadcast %cst_8 : f32 to vector<16x1xf32>
    %23 = arith.subf %22, %21 : vector<16x1xf32>
    %cst_9 = arith.constant 0.000000e+00 : f32
    %24 = vector.broadcast %cst_9 : f32 to vector<16x1xf32>
    %25 = arith.maximumf %23, %24 : vector<16x1xf32>
    %26 = math.sqrt %25 : vector<16x1xf32>
    %cst_10 = arith.constant 0.47942555 : f32
    %27 = vector.broadcast %cst_10 : f32 to vector<16x1xf32>
    %28 = arith.mulf %26, %27 : vector<16x1xf32>
    %29 = arith.subf %20, %28 : vector<16x1xf32>
    %cst_11 = arith.constant -0.87758255 : f32
    %30 = vector.broadcast %cst_11 : f32 to vector<16x1xf32>
    %31 = arith.cmpf olt, %18, %30 : vector<16x1xf32>
    %cst_12 = arith.constant -1.000000e+00 : f32
    %32 = vector.broadcast %cst_12 : f32 to vector<16x1xf32>
    %33 = arith.select %31, %32, %29 : vector<16x1xi1>, vector<16x1xf32>
    %cst_13 = arith.constant 6.400000e+01 : f32
    %34 = vector.broadcast %cst_13 : f32 to vector<16x1xf32>
    %35 = arith.mulf %34, %33 : vector<16x1xf32>
    %c128_i32_14 = arith.constant 128 : i32
    %36 = arith.muli %arg1, %c128_i32_14 : i32
    %37 = vector.broadcast %36 : i32 to vector<16x1xi32>
    %38 = arith.cmpi sge, %4, %37 : vector<16x1xi32>
    %c1_i32 = arith.constant 1 : i32
    %39 = arith.addi %arg1, %c1_i32 : i32
    %c128_i32_15 = arith.constant 128 : i32
    %40 = arith.muli %39, %c128_i32_15 : i32
    %41 = vector.broadcast %40 : i32 to vector<16x1xi32>
    %42 = arith.cmpi slt, %4, %41 : vector<16x1xi32>
    %43 = arith.andi %38, %42 : vector<16x1xi1>
    %c0_16 = arith.constant 0 : index
    %c0_17 = arith.constant 0 : index
    %44 = vector.load %arg7[%c0_16, %c0_17] : memref<16x1xf32, #tpu.memory_space<vmem>>, vector<16x1xf32>
    %cst_18 = arith.constant 0.000000e+00 : f32
    %45 = vector.broadcast %cst_18 : f32 to vector<16x1xf32>
    %46 = arith.select %43, %35, %45 : vector<16x1xi1>, vector<16x1xf32>
    %47 = arith.addf %44, %46 : vector<16x1xf32>
    %c0_19 = arith.constant 0 : index
    %c0_20 = arith.constant 0 : index
    %48 = vector.load %arg7[%c0_19, %c0_20] : memref<16x1xf32, #tpu.memory_space<vmem>>, vector<16x1xf32>
    tpu.vector_store %arg7[%c0_19, %c0_20], %47 {strides = array<i32>} : memref<16x1xf32, #tpu.memory_space<vmem>>, vector<16x1xf32>,
    %cst_21 = arith.constant 6.400000e+01 : f32
    %49 = vector.broadcast %cst_21 : f32 to vector<16x128xf32>
    %50 = arith.mulf %3, %49 : vector<16x128xf32>
    %51 = vector.shape_cast %35 : vector<16x1xf32> to vector<16x1xf32>
    %52 = vector.broadcast %51 : vector<16x1xf32> to vector<16x128xf32>
    %53 = arith.select %10, %52, %50 : vector<16x128xi1>, vector<16x128xf32>
    %c0_22 = arith.constant 0 : index
    %c0_23 = arith.constant 0 : index
    %54 = vector.load %arg5[%c0_22, %c0_23] : memref<16x1xf32, #tpu.memory_space<vmem>>, vector<16x1xf32>
    %cst_24 = arith.constant dense<0xFF800000> : vector<16xf32>
    %55 = vector.multi_reduction <maximumf>, %53, %cst_24 [1] : vector<16x128xf32> to vector<16xf32>
    %56 = vector.shape_cast %55 : vector<16xf32> to vector<16x1xf32>
    %57 = arith.maximumf %54, %56 : vector<16x1xf32>
    %c0_25 = arith.constant 0 : index
    %c0_26 = arith.constant 0 : index
    %58 = vector.load %arg6[%c0_25, %c0_26] : memref<16x1xf32, #tpu.memory_space<vmem>>, vector<16x1xf32>
    %59 = arith.subf %54, %57 : vector<16x1xf32>
    %60 = math.exp %59 : vector<16x1xf32>
    %61 = arith.mulf %58, %60 : vector<16x1xf32>
    %62 = vector.broadcast %57 : vector<16x1xf32> to vector<16x128xf32>
    %63 = arith.subf %53, %62 : vector<16x128xf32>
    %64 = math.exp %63 : vector<16x128xf32>
    %cst_27 = arith.constant dense<0.000000e+00> : vector<16xf32>
    %65 = vector.multi_reduction <add>, %64, %cst_27 [1] : vector<16x128xf32> to vector<16xf32>
    %66 = vector.shape_cast %65 : vector<16xf32> to vector<16x1xf32>
    %67 = arith.addf %61, %66 : vector<16x1xf32>
    %c0_28 = arith.constant 0 : index
    %c0_29 = arith.constant 0 : index
    %68 = vector.load %arg6[%c0_28, %c0_29] : memref<16x1xf32, #tpu.memory_space<vmem>>, vector<16x1xf32>
    tpu.vector_store %arg6[%c0_28, %c0_29], %67 {strides = array<i32>} : memref<16x1xf32, #tpu.memory_space<vmem>>, vector<16x1xf32>,
    %c0_30 = arith.constant 0 : index
    %c0_31 = arith.constant 0 : index
    %69 = vector.load %arg5[%c0_30, %c0_31] : memref<16x1xf32, #tpu.memory_space<vmem>>, vector<16x1xf32>
    tpu.vector_store %arg5[%c0_30, %c0_31], %57 {strides = array<i32>} : memref<16x1xf32, #tpu.memory_space<vmem>>, vector<16x1xf32>,
    %c0_i32_32 = arith.constant 0 : i32
    %70 = arith.cmpi eq, %arg1, %c0_i32_32 : i32
    %71 = arith.extui %70 : i1 to i32
    %c0_i32_33 = arith.constant 0 : i32
    %72 = arith.cmpi ne, %71, %c0_i32_33 : i32
    scf.if %72 {
      %c0_34 = arith.constant 0 : index
      %c0_35 = arith.constant 0 : index
      %73 = vector.load %arg5[%c0_34, %c0_35] : memref<16x1xf32, #tpu.memory_space<vmem>>, vector<16x1xf32>
      %c0_36 = arith.constant 0 : index
      %c0_37 = arith.constant 0 : index
      %74 = vector.load %arg6[%c0_36, %c0_37] : memref<16x1xf32, #tpu.memory_space<vmem>>, vector<16x1xf32>
      %75 = math.log %74 : vector<16x1xf32>
      %76 = arith.addf %73, %75 : vector<16x1xf32>
      %c0_38 = arith.constant 0 : index
      %c0_39 = arith.constant 0 : index
      %77 = vector.load %arg7[%c0_38, %c0_39] : memref<16x1xf32, #tpu.memory_space<vmem>>, vector<16x1xf32>
      %78 = arith.subf %76, %77 : vector<16x1xf32>
      %c16_i32 = arith.constant 16 : i32
      %79 = arith.muli %arg0, %c16_i32 : i32
      %80 = tpu.iota {dimensions = array<i32: 0>} : vector<16x1xi32>
      %81 = vector.broadcast %79 : i32 to vector<16x1xi32>
      %82 = arith.addi %81, %80 : vector<16x1xi32>
      %c16_i32_40 = arith.constant 16 : i32
      %83 = vector.broadcast %c16_i32_40 : i32 to vector<16x1xi32>
      %84 = arith.cmpi slt, %82, %83 : vector<16x1xi32>
      %cst_41 = arith.constant 0.000000e+00 : f32
      %85 = vector.broadcast %cst_41 : f32 to vector<16x1xf32>
      %86 = arith.select %84, %78, %85 : vector<16x1xi1>, vector<16x1xf32>
      %c0_42 = arith.constant 0 : index
      %c0_43 = arith.constant 0 : index
      %87 = vector.load %arg4[%c0_42, %c0_43] : memref<16x1xf32, #tpu.memory_space<vmem>>, vector<16x1xf32>
      tpu.vector_store %arg4[%c0_42, %c0_43], %86 {strides = array<i32>} : memref<16x1xf32, #tpu.memory_space<vmem>>, vector<16x1xf32>,
    } else {
    }
    return
  }
  func.func @transform_0(%arg0: i32, %arg1: i32) -> (i32, i32) {
    %c0_i32 = arith.constant 0 : i32
    %c0_i32_0 = arith.constant 0 : i32
    return %arg0, %c0_i32 : i32, i32
  }
  func.func @transform_1(%arg0: i32, %arg1: i32) -> (i32, i32) {
    %c0_i32 = arith.constant 0 : i32
    return %arg0, %arg1 : i32, i32
  }
  func.func @transform_2(%arg0: i32, %arg1: i32) -> (i32, i32) {
    %c0_i32 = arith.constant 0 : i32
    %c0_i32_0 = arith.constant 0 : i32
    return %arg0, %c0_i32 : i32, i32
  }
}

</mosaic_0001>

<llo_original>
// kernel: tpu_custom_call.1
$region0: #{tpu_custom_call.1}
  #allocation0 [shape = 'u32[]', space=smem, size = 0x4, offset = 0x4, fixed_abs, tag = 'smem constant byte address 0x4 - core index']
  #allocation1 [shape = 'u32[72,128]{1,0:T(1,128)}', space=vmem, size = 0x9000, scoped, tag = 'internal scratch']
  #allocation2 [shape = 'f32[16,1]{1,0:T(8,128)}', space=vmem, size = 0x2000, scoped, tag = 'scratch operand']
  #allocation3 [shape = 'f32[16,1]{1,0:T(8,128)}', space=vmem, size = 0x2000, scoped, tag = 'scratch operand']
  #allocation4 [shape = 'f32[16,1]{1,0:T(8,128)}', space=vmem, size = 0x2000, scoped, tag = 'scratch operand']
  %s0 = inlined_call_operand.vmem [shape: s32[16,1], index: 0, kind: input, shape index: {}]
  %s1 = inlined_call_operand.vmem [shape: f32[16,128], index: 1, kind: input, shape index: {}]
  %s2 = inlined_call_operand.vmem [shape: f32[16,1], index: 2, kind: output, shape index: {}]
  %s3 = sld [smem:[#allocation0]]
  $region26: #{tpu_custom_call.1} parent=0
    _
  %s5 = ssub.s32 1, %s3
  %s6 = scalar_select 0, %s5, %s3
  // Predicated region
  $region2: #{tpu_custom_call.1} parent=0 // pred_check
    _
  $region3: #{tpu_custom_call.1} parent=0 // pred_check_branch
    %8 = sbr.rel (0) target = $region5
  $region4: #{tpu_custom_call.1} parent=0 // pred_region
    _
  $region5: #{tpu_custom_call.1} parent=0 // pred_fallthru
    _
  // Predicated region
  $region6: #{tpu_custom_call.1} parent=0 // pred_check
    _
  $region7: #{tpu_custom_call.1} parent=0 // pred_check_branch
    %10 = sbr.rel (0) target = $region9
  $region8: #{tpu_custom_call.1} parent=0 // pred_region
    _
  $region9: #{tpu_custom_call.1} parent=0 // pred_fallthru
    _
  %p11 = scmp.eq.s32.totalorder 0, 0
  // Predicated region
  $region10: #{tpu_custom_call.1} parent=0 // pred_check
    %p12 = pneg %p11
  $region11: #{tpu_custom_call.1} parent=0 // pred_check_branch
    %14 = sbr.rel (%p12) target = $region13
  $region12: #{tpu_custom_call.1} parent=0 // pred_region
    %vm15 = vcmask 7168
    %16 = vst.msk [vmem:[#allocation2] sm:$0xff] %vm15, -inf
    %17 = vst.msk [vmem:[#allocation2 + $0x8] sm:$0xff] %vm15, -inf
    %18 = vst.msk [vmem:[#allocation3] sm:$0xff] %vm15, 0.0
    %19 = vst.msk [vmem:[#allocation3 + $0x8] sm:$0xff] %vm15, 0.0
    %20 = vst.msk [vmem:[#allocation4] sm:$0xff] %vm15, 0.0
    %21 = vst.msk [vmem:[#allocation4 + $0x8] sm:$0xff] %vm15, 0.0
  $region13: #{tpu_custom_call.1} parent=0 // pred_fallthru
    _
  %v22 = vld [vmem:[%s1] sm:$0xff]
  %v23 = vld [vmem:[%s1 + $0x8] sm:$0xff]
  %v24 = vld [vmem:[%s0] sm:$0xff]
  %v25 = vld [vmem:[%s0 + $0x8] sm:$0xff]
  %s26 = smul.u32 0, 128
  %v27 = vlaneseq
  %v28 = vand.u32 %v27, 127
  %v29 = vstv %s26
  %v30 = vadd.s32 %v29, %v28
  %31 = vset.pattern.permute.xlu0 0
  %32 = vperm.xlu0 %31, %v24
  %v33 = vpop.permute.xlu0 %32
  %34 = vset.pattern.permute.xlu0 0
  %35 = vperm.xlu0 %34, %v25
  %v36 = vpop.permute.xlu0 %35
  %vm37 = vcmp.eq.s32.totalorder %v30, %v33
  %vm38 = vcmp.eq.s32.totalorder %v30, %v36
  %v39 = vsel %vm37, %v22, 0.0
  %v40 = vsel %vm38, %v23, 0.0
  %41 = vadd.xlane.f32.xlu0 %v39
  %v42 = vpop.xlane.xlu0 %41
  %43 = vadd.xlane.f32.xlu0 %v40
  %v44 = vpop.xlane.xlu0 %43
  %v45 = vmax.f32 %v42, -0.999
  %v46 = vmax.f32 %v44, -0.999
  %v47 = vmin.f32 %v45, 0.999
  %v48 = vmin.f32 %v46, 0.999
  %v49 = vmul.f32 %v47, 0.87758255
  %v50 = vmul.f32 %v48, 0.87758255
  %v51 = vmul.f32 %v47, %v47
  %v52 = vmul.f32 %v48, %v48
  %v53 = vsub.f32 1.0, %v51
  %v54 = vsub.f32 1.0, %v52
  %v55 = vmax.f32 %v53, 0.0
  %v56 = vmax.f32 %v54, 0.0
  %v57 = vrsqrt.pop %v55
  %v58 = vmul.f32 %v57, %v55
  %v59 = vmul.f32 %v58, %v57
  %v60 = vmul.f32 0.5, %v59
  %v61 = vsub.f32 1.5, %v60
  %v62 = vmul.f32 %v57, %v61
  %v63 = vmul.f32 %v55, %v62
  %vm64 = vcmp.eq.f32.partialorder %v55, inf
  %v65 = vsel %vm64, %v55, %v63
  %vm66 = vcmp.eq.f32.partialorder %v55, 0.0
  %v67 = vand.u32 %v55, 2147483648
  %v68 = vsel %vm66, %v67, %v65
  %v69 = vrsqrt.pop %v56
  %v70 = vmul.f32 %v69, %v56
  %v71 = vmul.f32 %v70, %v69
  %v72 = vmul.f32 0.5, %v71
  %v73 = vsub.f32 1.5, %v72
  %v74 = vmul.f32 %v69, %v73
  %v75 = vmul.f32 %v56, %v74
  %vm76 = vcmp.eq.f32.partialorder %v56, inf
  %v77 = vsel %vm76, %v56, %v75
  %vm78 = vcmp.eq.f32.partialorder %v56, 0.0
  %v79 = vand.u32 %v56, 2147483648
  %v80 = vsel %vm78, %v79, %v77
  %v81 = vmul.f32 %v68, 0.47942555
  %v82 = vmul.f32 %v80, 0.47942555
  %v83 = vsub.f32 %v49, %v81
  %v84 = vsub.f32 %v50, %v82
  %vm85 = vcmp.lt.f32.partialorder %v47, -0.87758255
  %vm86 = vcmp.lt.f32.partialorder %v48, -0.87758255
  %v87 = vsel %vm85, -1.0, %v83
  %v88 = vsel %vm86, -1.0, %v84
  %v89 = vmul.f32 %v87, 64.0
  %v90 = vmul.f32 %v88, 64.0
  %vm91 = vcmp.ge.s32.totalorder %v24, %v29
  %vm92 = vcmp.ge.s32.totalorder %v25, %v29
  %s93 = sadd.s32 0, 1
  %s94 = smul.u32 %s93, 128
  %v95 = vstv %s94
  %vm96 = vcmp.lt.s32.totalorder %v24, %v95
  %vm97 = vcmp.lt.s32.totalorder %v25, %v95
  %vm98 = vmand %vm91, %vm96
  %vm99 = vmand %vm92, %vm97
  %v100 = vld [vmem:[#allocation4] sm:$0xff]
  %v101 = vld [vmem:[#allocation4 + $0x8] sm:$0xff]
  %v102 = vsel %vm98, %v89, 0.0
  %v103 = vsel %vm99, %v90, 0.0
  %v104 = vadd.f32 %v100, %v102
  %v105 = vadd.f32 %v101, %v103
  %vm106 = vcmask 7168
  %107 = vst.msk [vmem:[#allocation4] sm:$0xff] %vm106, %v104
  %108 = vst.msk [vmem:[#allocation4 + $0x8] sm:$0xff] %vm106, %v105
  %v109 = vmul.f32 %v22, 64.0
  %v110 = vmul.f32 %v23, 64.0
  %v111 = vsel %vm37, %v89, %v109
  %v112 = vsel %vm38, %v90, %v110
  %v113 = vld [vmem:[#allocation2] sm:$0xff]
  %v114 = vld [vmem:[#allocation2 + $0x8] sm:$0xff]
  %115 = vmax.xlane.f32.xlu0 %v111
  %v116 = vpop.xlane.xlu0 %115
  %117 = vmax.xlane.f32.xlu0 %v112
  %v118 = vpop.xlane.xlu0 %117
  %v119 = vmax.f32 %v113, %v116
  %v120 = vmax.f32 %v114, %v118
  %v121 = vld [vmem:[#allocation3] sm:$0xff]
  %v122 = vld [vmem:[#allocation3 + $0x8] sm:$0xff]
  %v123 = vsub.f32 %v113, %v119
  %v124 = vsub.f32 %v114, %v120
  %v125 = vmul.f32 %v123, 1.442695
  %v126 = vpow.pop %v125
  %v127 = vmul.f32 %v124, 1.442695
  %v128 = vpow.pop %v127
  %v129 = vmul.f32 %v121, %v126
  %v130 = vmul.f32 %v122, %v128
  %132 = vset.pattern.permute.xlu0 0
  %133 = vperm.xlu0 %132, %v119
  %v134 = vpop.permute.xlu0 %133
  %137 = vset.pattern.permute.xlu0 0
  %138 = vperm.xlu0 %137, %v120
  %v139 = vpop.permute.xlu0 %138
  %v141 = vsub.f32 %v111, %v134
  %v142 = vsub.f32 %v112, %v139
  %v143 = vmul.f32 %v141, 1.442695
  %v144 = vpow.pop %v143
  %v145 = vmul.f32 %v142, 1.442695
  %v146 = vpow.pop %v145
  %147 = vadd.xlane.f32.xlu0 %v144
  %v148 = vpop.xlane.xlu0 %147
  %149 = vadd.xlane.f32.xlu0 %v146
  %v150 = vpop.xlane.xlu0 %149
  %v151 = vadd.f32 %v129, %v148
  %v152 = vadd.f32 %v130, %v150
  %153 = vst.msk [vmem:[#allocation3] sm:$0xff] %vm106, %v151
  %154 = vst.msk [vmem:[#allocation3 + $0x8] sm:$0xff] %vm106, %v152
  %155 = vst.msk [vmem:[#allocation2] sm:$0xff] %vm106, %v119
  %156 = vst.msk [vmem:[#allocation2 + $0x8] sm:$0xff] %vm106, %v120
  // Predicated region
  $region14: #{tpu_custom_call.1} parent=0 // pred_check
    %p157 = pneg %p11
  $region15: #{tpu_custom_call.1} parent=0 // pred_check_branch
    %159 = sbr.rel (%p157) target = $region17
  $region16: #{tpu_custom_call.1} parent=0 // pred_region
    %v160 = vld [vmem:[#allocation2] sm:$0xff]
    %v161 = vld [vmem:[#allocation2 + $0x8] sm:$0xff]
    %v162 = vld [vmem:[#allocation3] sm:$0xff]
    %v163 = vld [vmem:[#allocation3 + $0x8] sm:$0xff]
    %v164 = vlog2.pop %v162
    %v165 = vmul.f32 %v164, 0.6931472
    %v166 = vlog2.pop %v163
    %v167 = vmul.f32 %v166, 0.6931472
    %v168 = vadd.f32 %v160, %v165
    %v169 = vadd.f32 %v161, %v167
    %v170 = vld [vmem:[#allocation4] sm:$0xff]
    %v171 = vld [vmem:[#allocation4 + $0x8] sm:$0xff]
    %v172 = vsub.f32 %v168, %v170
    %v173 = vsub.f32 %v169, %v171
    %s174 = smul.u32 0, 16
    %v175 = vlaneseq
    %v176 = vshrl.u32 %v175, 7
    %v177 = vadd.s32 %v176, 8
    %v178 = vstv %s174
    %v179 = vadd.s32 %v178, %v176
    %v180 = vadd.s32 %v178, %v177
    %vm181 = vcmp.lt.s32.totalorder %v179, 16
    %vm182 = vcmp.lt.s32.totalorder %v180, 16
    %v183 = vsel %vm181, %v172, 0.0
    %v184 = vsel %vm182, %v173, 0.0
    %185 = vst.msk [vmem:[%s2] sm:$0xff] %vm106, %v183
    %186 = vst.msk [vmem:[%s2 + $0x8] sm:$0xff] %vm106, %v184
  $region17: #{tpu_custom_call.1} parent=0 // pred_fallthru
    _
  // Predicated region
  $region18: #{tpu_custom_call.1} parent=0 // pred_check
    _
  $region19: #{tpu_custom_call.1} parent=0 // pred_check_branch
    %188 = sbr.rel (0) target = $region21
  $region20: #{tpu_custom_call.1} parent=0 // pred_region
    _
  $region21: #{tpu_custom_call.1} parent=0 // pred_fallthru
    _
  // Predicated region
  $region22: #{tpu_custom_call.1} parent=0 // pred_check
    _
  $region23: #{tpu_custom_call.1} parent=0 // pred_check_branch
    %190 = sbr.rel (0) target = $region25
  $region24: #{tpu_custom_call.1} parent=0 // pred_region
    _
  $region25: #{tpu_custom_call.1} parent=0 // pred_fallthru
    _

</llo_original>
